<compile_context>
chip_gen: v6e
topology: v6e:2x2x1
jax: 0.10.0
libtpu: 0.0.40
codegen_flags: <defaults>
</compile_context>

<pallas_src>
import functools
import math

import numpy as np

import jax
import jax.numpy as jnp
from jax.experimental import pallas as pl
from jax.experimental.pallas import tpu as pltpu


# ----------------------- fused parameter-slab layout (rows) -----------------------
_SLAB_LANES = 512
_R_W_GRU = 0      # [128,512] GRU: W_ih stacked over W_hh, gate sections r|z|n_i|n_h
_R_W_IN = 128     # [128,256] lidar-L1 (cols 0:128) | non-lidar-L1 (cols 128:256)
_R_W_L2 = 256     # [128,128] lidar-L2 -> emb
_R_W_MID = 384    # [128,128] non-lidar-L2 (cols 0:64) | memory processor (cols 64:128)
_R_W_OUT1 = 512   # [128,128] out-MLP layer 1
_R_W_FIN = 640    # [128,128] final layer: actor 2A logits | critic value
_R_B_GRU = 768    # [1,512]
_R_B_IN = 776     # [1,256]
_R_B_L2 = 784     # [1,128]
_R_B_MID = 792    # [1,128]
_R_B_OUT1 = 800   # [1,128]
_R_B_FIN = 808    # [1,128]
_SLAB_ROWS = 816


# ----------------------------------- kernel ---------------------------------------
def _fused_kernel(act_ref, p_ref, out_ref):
    f32 = jnp.float32

    def dot(x, w):                       # bf16 MXU matmul, f32 accumulation
        return jnp.dot(x.astype(w.dtype), w, preferred_element_type=f32)

    def elu(x):                          # nn.ELU(alpha=1.0), no inf on dead branch
        return jnp.where(x > 0.0, x, jnp.exp(jnp.minimum(x, 0.0)) - 1.0)

    def sigmoid(x):                      # one EUP transcendental, no divide
        return 0.5 * (jnp.tanh(0.5 * x) + 1.0)

    # resident fused weights: static, (8,128)-aligned slices of the parameter slab
    w_gru = p_ref[_R_W_GRU:_R_W_GRU + 128, :]
    w_in = p_ref[_R_W_IN:_R_W_IN + 128, 0:256]
    w_l2 = p_ref[_R_W_L2:_R_W_L2 + 128, 0:128]
    w_mid = p_ref[_R_W_MID:_R_W_MID + 128, 0:128]
    w_o1 = p_ref[_R_W_OUT1:_R_W_OUT1 + 128, 0:128]
    w_fin = p_ref[_R_W_FIN:_R_W_FIN + 128, 0:128]
    b_gru = p_ref[_R_B_GRU:_R_B_GRU + 1, :].astype(f32)
    b_in = p_ref[_R_B_IN:_R_B_IN + 1, 0:256].astype(f32)
    b_l2 = p_ref[_R_B_L2:_R_B_L2 + 1, 0:128].astype(f32)
    b_mid = p_ref[_R_B_MID:_R_B_MID + 1, 0:128].astype(f32)
    b_o1 = p_ref[_R_B_OUT1:_R_B_OUT1 + 1, 0:128].astype(f32)
    b_fin = p_ref[_R_B_FIN:_R_B_FIN + 1, 0:128].astype(f32)

    a = act_ref[...]                     # [TB,256] activation slab
    x0 = a[:, 0:128]                     # lidar @0:LD | non-lidar @64:64+NL
    h = a[:, 128:256].astype(f32)        # fused hidden state (real lanes 64:128)

    # M1: lidar-L1 and non-lidar-L1 in one matmul
    y1 = elu(dot(x0, w_in) + b_in)       # [TB,256]
    t = y1[:, 0:128]                     # lidar-L1  (actor 0:64 | critic 64:128)
    nl1 = y1[:, 128:256]                 # non-lidar-L1 (actor|critic in lanes 0:64)

    # M2: lidar-L2 -> emb (actor|critic in lanes 0:64; lanes 64:128 stay exactly 0)
    emb = elu(dot(t, w_l2) + b_l2)

    # M3: full single-step GRU. [emb|h] is one add (disjoint non-zero lanes);
    #     gate sections r|z|n_i|n_h are 128-lane aligned and the gates live in
    #     lanes 64:128 of their section (same layout as h -> no lane shift).
    g = dot(emb + h, w_gru) + b_gru      # [TB,512]
    r = sigmoid(g[:, 0:128])
    z = sigmoid(g[:, 128:256])
    n = jnp.tanh(g[:, 256:384] + r * g[:, 384:512])
    h_new = (1.0 - z) * n + z * h        # padding lanes stay exactly 0

    # M4: non-lidar-L2 and memory-processor fused on (nl1 | h_new); the result
    #     is exactly concat(non_lidar_out, memory_processed) in 128 lanes.
    y4 = elu(dot(nl1 + h_new, w_mid) + b_mid)

    # M5 / M6: out MLP
    hcat = elu(dot(y4, w_o1) + b_o1)
    fin = dot(hcat, w_fin) + b_fin       # actor logits @0:2A | critic value @2A

    # single lane-dense [TB,256] output slab, two aligned full-width stores
    out_ref[:, 0:128] = fin
    out_ref[:, 128:256] = h_new


# ---------------------------------- wrapper ----------------------------------------
def _pick_batch_tiling(batch, batch_block):
    batch_block = max(16, (batch_block // 16) * 16)
    bp = max(16, -(-batch // 16) * 16)
    if bp <= 128:
        return bp, bp                    # tiny batch: one block
    if bp <= 2 * batch_block:
        tb = -(-bp // 32) * 16           # ~half the batch, 16-row aligned
        return 2 * tb, tb                # >=2 grid steps (v7x megacore)
    tb = batch_block
    return -(-batch // tb) * tb, tb


def actor_critic_forward(param_slab, x, h_actor, h_critic, cfg, shift, scale,
                         batch_block=512):
    """Fused actor+critic inference step. Returns
    (actor_logits, value, alpha, beta, action_mean, h_new_actor, h_new_critic)."""
    NL = cfg["non_lidar_dim"]
    LD = cfg["lidar_dim"]
    G = cfg["gru_dim"]
    A = cfg["num_actions"]
    B = x.shape[0]
    assert x.shape[1] == NL + LD
    assert LD <= 64 and NL <= 64 and 2 * G <= 64 and 2 * A + 1 <= 128

    Bp, TB = _pick_batch_tiling(B, batch_block)
    dt = param_slab.dtype

    # activation slab [B,256]:
    #   lidar @0:LD | 0 | non_lidar @64:64+NL | 0 | h_actor @192:192+G | h_critic | 0
    pieces = [(x[:, NL:], LD), (None, 64 - LD),
              (x[:, :NL], NL), (None, 128 - NL),
              (h_actor, G), (h_critic, G), (None, 64 - 2 * G)]
    cols = [p if p is not None else jnp.zeros((B, w), x.dtype)
            for p, w in pieces if w > 0]
    act = jnp.concatenate(cols, axis=1).astype(dt)
    if Bp > B:
        act = jnp.pad(act, ((0, Bp - B), (0, 0)))

    out = pl.pallas_call(
        _fused_kernel,
        out_shape=jax.ShapeDtypeStruct((Bp, 256), jnp.float32),
        grid_spec=pltpu.PrefetchScalarGridSpec(
            num_scalar_prefetch=0,
            grid=(Bp // TB,),
            in_specs=[
                pl.BlockSpec((TB, 256), lambda i: (i, 0)),
                pl.BlockSpec((_SLAB_ROWS, _SLAB_LANES), lambda i: (0, 0)),
            ],
            out_specs=pl.BlockSpec((TB, 256), lambda i: (i, 0)),
        ),
        compiler_params=pltpu.CompilerParams(
            dimension_semantics=("parallel",)),
    )(act, param_slab)

    logits = out[:B, 0:2 * A]
    value = out[:B, 2 * A:2 * A + 1]
    h_a = out[:B, 192:192 + G]
    h_c = out[:B, 192 + G:192 + 2 * G]

    # Beta head (get_beta_parameters / act_inference) on [B,A] in plain XLA,
    # fused into the same jit -> no narrow masked stores inside the kernel.
    ratio = jax.nn.sigmoid(logits[:, :A] + shift)    # == act_inference mean
    s = (jax.nn.softplus(logits[:, A:]) + 1.0) * scale
    alpha = ratio * s + 1e-06
    beta = (s - ratio * s) + 0.0001
    return logits, value, alpha, beta, ratio, h_a, h_c


# ----------------------- host-side fused parameter-slab packing ---------------------
def build_param_slab(actor_p, critic_p, cfg, dtype=jnp.bfloat16):
    NL = cfg["non_lidar_dim"]; LD = cfg["lidar_dim"]
    L1, L2 = cfg["lidar_dims"]; G = cfg["gru_dim"]
    HP = cfg["hist_dims"][0]; N1, N2 = cfg["nl_dims"]; O1 = cfg["out_dims"][0]
    A = cfg["num_actions"]

    # fused-layout constraints (actor/critic share half-sections)
    assert LD <= 64 and NL <= 64 and L1 <= 64
    assert 2 * L2 <= 64 and 2 * G <= 64 and 2 * HP <= 64
    assert 2 * N1 <= 64 and 2 * N2 <= 64 and 2 * O1 <= 128
    assert 2 * A + 1 <= 128

    S = np.zeros((_SLAB_ROWS, _SLAB_LANES), np.float32)
    a = {k: np.asarray(v, np.float32) for k, v in actor_p.items()}
    c = {k: np.asarray(v, np.float32) for k, v in critic_p.items()}

    # --- GRU tile: rows 0:2*L2 = emb (actor|critic), rows 64:64+2G = h (actor|critic)
    #     gate cols: r 0:128 | z 128:256 | n_i 256:384 | n_h 384:512;
    #     actor gate at local 64:64+G, critic at 64+G:64+2G of each section.
    Wg = S[_R_W_GRU:_R_W_GRU + 128]
    bg = S[_R_B_GRU]
    for gate in range(3):                          # PyTorch gate order r, z, n
        awi = a["wih"][:, gate * G:(gate + 1) * G]
        cwi = c["wih"][:, gate * G:(gate + 1) * G]
        awh = a["whh"][:, gate * G:(gate + 1) * G]
        cwh = c["whh"][:, gate * G:(gate + 1) * G]
        ci = gate * 128 if gate < 2 else 256       # input-part output section
        ch = gate * 128 if gate < 2 else 384       # hidden-part output section
        Wg[0:L2, ci + 64:ci + 64 + G] = awi
        Wg[L2:2 * L2, ci + 64 + G:ci + 64 + 2 * G] = cwi
        Wg[64:64 + G, ch + 64:ch + 64 + G] = awh
        Wg[64 + G:64 + 2 * G, ch + 64 + G:ch + 64 + 2 * G] = cwh
        bia = a["bih"][gate * G:(gate + 1) * G]; bic = c["bih"][gate * G:(gate + 1) * G]
        bha = a["bhh"][gate * G:(gate + 1) * G]; bhc = c["bhh"][gate * G:(gate + 1) * G]
        if gate < 2:                               # r, z: b_ih + b_hh share columns
            bg[ci + 64:ci + 64 + G] = bia + bha
            bg[ci + 64 + G:ci + 64 + 2 * G] = bic + bhc
        else:                                      # n: keep input/hidden bias split
            bg[ci + 64:ci + 64 + G] = bia
            bg[ci + 64 + G:ci + 64 + 2 * G] = bic
            bg[ch + 64:ch + 64 + G] = bha
            bg[ch + 64 + G:ch + 64 + 2 * G] = bhc

    # --- M1: lidar-L1 (rows 0:LD -> cols 0:2L1) | non-lidar-L1 (rows 64:64+NL -> cols 128:..)
    Wi = S[_R_W_IN:_R_W_IN + 128]; bi = S[_R_B_IN]
    Wi[0:LD, 0:L1] = a["lw1"];                 Wi[0:LD, L1:2 * L1] = c["lw1"]
    Wi[64:64 + NL, 128:128 + N1] = a["nw1"];   Wi[64:64 + NL, 128 + N1:128 + 2 * N1] = c["nw1"]
    bi[0:L1] = a["lb1"];                       bi[L1:2 * L1] = c["lb1"]
    bi[128:128 + N1] = a["nb1"];               bi[128 + N1:128 + 2 * N1] = c["nb1"]

    # --- M2: lidar-L2 -> emb
    Wl = S[_R_W_L2:_R_W_L2 + 128]; bl = S[_R_B_L2]
    Wl[0:L1, 0:L2] = a["lw2"];                 Wl[L1:2 * L1, L2:2 * L2] = c["lw2"]
    bl[0:L2] = a["lb2"];                       bl[L2:2 * L2] = c["lb2"]

    # --- M4: non-lidar-L2 (rows 0:2N1 -> cols 0:2N2) | memory processor (rows 64.. -> cols 64..)
    Wm = S[_R_W_MID:_R_W_MID + 128]; bm = S[_R_B_MID]
    Wm[0:N1, 0:N2] = a["nw2"];                 Wm[N1:2 * N1, N2:2 * N2] = c["nw2"]
    Wm[64:64 + G, 64:64 + HP] = a["mw1"];      Wm[64 + G:64 + 2 * G, 64 + HP:64 + 2 * HP] = c["mw1"]
    bm[0:N2] = a["nb2"];                       bm[N2:2 * N2] = c["nb2"]
    bm[64:64 + HP] = a["mb1"];                 bm[64 + HP:64 + 2 * HP] = c["mb1"]

    # --- M5: out-MLP layer 1 on concat(nl2, mem)
    Wo = S[_R_W_OUT1:_R_W_OUT1 + 128]; bo = S[_R_B_OUT1]
    Wo[0:N2, 0:O1] = a["ow1"][:N2];            Wo[64:64 + HP, 0:O1] = a["ow1"][N2:]
    Wo[N2:2 * N2, O1:2 * O1] = c["ow1"][:N2];  Wo[64 + HP:64 + 2 * HP, O1:2 * O1] = c["ow1"][N2:]
    bo[0:O1] = a["ob1"];                       bo[O1:2 * O1] = c["ob1"]

    # --- M6: final layer (actor 2A logits | critic value at col 2A)
    Wf = S[_R_W_FIN:_R_W_FIN + 128]; bf = S[_R_B_FIN]
    Wf[0:O1, 0:2 * A] = a["ow2"];              Wf[O1:2 * O1, 2 * A:2 * A + 1] = c["ow2"]
    bf[0:2 * A] = a["ob2"];                    bf[2 * A:2 * A + 1] = c["ob2"]

    return jnp.asarray(S, dtype)


# --------------------------- deterministic parameter init --------------------------
def _init_linear(key, in_dim, out_dim):
    k1, k2 = jax.random.split(key)
    bound = 1.0 / math.sqrt(in_dim)
    w = jax.random.uniform(k1, (in_dim, out_dim), jnp.float32, -bound, bound)
    b = jax.random.uniform(k2, (out_dim,), jnp.float32, -bound, bound)
    return w, b


def _init_branch(key, cfg, final_dim):
    NL = cfg["non_lidar_dim"]; LD = cfg["lidar_dim"]
    L1, L2 = cfg["lidar_dims"]; G = cfg["gru_dim"]
    HP = cfg["hist_dims"][0]; N1, N2 = cfg["nl_dims"]; O1 = cfg["out_dims"][0]
    ks = jax.random.split(key, 11)
    p = {}
    p["lw1"], p["lb1"] = _init_linear(ks[0], LD, L1)
    p["lw2"], p["lb2"] = _init_linear(ks[1], L1, L2)
    gb = 1.0 / math.sqrt(G)
    p["wih"] = jax.random.uniform(ks[2], (L2, 3 * G), jnp.float32, -gb, gb)
    p["whh"] = jax.random.uniform(ks[3], (G, 3 * G), jnp.float32, -gb, gb)
    p["bih"] = jax.random.uniform(ks[4], (3 * G,), jnp.float32, -gb, gb)
    p["bhh"] = jax.random.uniform(ks[5], (3 * G,), jnp.float32, -gb, gb)
    p["mw1"], p["mb1"] = _init_linear(ks[6], G, HP)
    p["nw1"], p["nb1"] = _init_linear(ks[7], NL, N1)
    p["nw2"], p["nb2"] = _init_linear(ks[8], N1, N2)
    p["ow1"], p["ob1"] = _init_linear(ks[9], N2 + HP, O1)
    p["ow2"], p["ob2"] = _init_linear(ks[10], O1, final_dim)
    return p


# ------------------------------ pure-JAX f32 reference ------------------------------
def _ref_branch(p, x, h0, non_lidar_dim, G):
    elu = lambda v: jnp.where(v > 0.0, v, jnp.expm1(jnp.minimum(v, 0.0)))
    non_lidar = x[:, :non_lidar_dim]
    lidar = x[:, non_lidar_dim:]
    t = elu(lidar @ p["lw1"] + p["lb1"])
    emb = elu(t @ p["lw2"] + p["lb2"])
    gi = emb @ p["wih"] + p["bih"]
    gh = h0 @ p["whh"] + p["bhh"]
    r = jax.nn.sigmoid(gi[:, :G] + gh[:, :G])
    z = jax.nn.sigmoid(gi[:, G:2 * G] + gh[:, G:2 * G])
    n = jnp.tanh(gi[:, 2 * G:] + r * gh[:, 2 * G:])
    h_new = (1.0 - z) * n + z * h0
    mem = elu(h_new @ p["mw1"] + p["mb1"])
    nl = elu(non_lidar @ p["nw1"] + p["nb1"])
    nl = elu(nl @ p["nw2"] + p["nb2"])
    cat = jnp.concatenate([nl, mem], axis=-1)
    hcat = elu(cat @ p["ow1"] + p["ob1"])
    logits = hcat @ p["ow2"] + p["ob2"]
    return logits, h_new


def _ref_beta(logits, A, shift, scale):
    ratio = jax.nn.sigmoid(logits[:, :A] + shift)
    s = (jax.nn.softplus(logits[:, A:]) + 1.0) * scale
    alpha = ratio * s
    beta = s - alpha
    return alpha + 1e-06, beta + 0.0001, ratio


# ------------------------------------- main -----------------------------------------
if __name__ == "__main__":
    cfg = dict(non_lidar_dim=16, lidar_dim=48, lidar_dims=(64, 32), gru_dim=32,
               hist_dims=(32,), nl_dims=(32, 32), out_dims=(32,), num_actions=4)
    BETA_INITIAL_LOGIT = 0.5
    BETA_INITIAL_SCALE = 5.0
    shift = math.log(BETA_INITIAL_LOGIT / (1.0 - BETA_INITIAL_LOGIT))
    BATCH = 8
    NUM_OBS = cfg["non_lidar_dim"] + cfg["lidar_dim"]
    A = cfg["num_actions"]
    G = cfg["gru_dim"]

    key = jax.random.PRNGKey(0)
    k_obs1, k_obs2, k_actor, k_critic = jax.random.split(key, 4)

    actor_p = _init_branch(k_actor, cfg, 2 * A)
    critic_p = _init_branch(k_critic, cfg, 1)
    param_slab = build_param_slab(actor_p, critic_p, cfg, dtype=jnp.bfloat16)

    x1 = jax.random.normal(k_obs1, (BATCH, NUM_OBS), jnp.float32)
    x2 = jax.random.normal(k_obs2, (BATCH, NUM_OBS), jnp.float32)
    h0 = jnp.zeros((BATCH, G), jnp.float32)   # PyTorch GRU: None hidden -> zeros

    fwd = jax.jit(functools.partial(actor_critic_forward, cfg=cfg,
                                    shift=shift, scale=BETA_INITIAL_SCALE))

    # TODO(synk): training-mode path (masks + unpad_trajectories, multi-step GRU
    # rollout) and Beta distribution sampling/log_prob/entropy are not implemented;
    # this is the single-step inference forward only.
    step1 = fwd(param_slab, x1, h0, h0)
    jax.block_until_ready(step1)
    step2 = fwd(param_slab, x2, step1[5], step1[6])   # recurrent second step
    jax.block_until_ready(step2)

    # reference (pure JAX, f32 weights; kernel uses bf16 weights -> loose tolerance)
    def ref_step(x, ha, hc):
        rl, rha = _ref_branch(actor_p, x, ha, cfg["non_lidar_dim"], G)
        rv, rhc = _ref_branch(critic_p, x, hc, cfg["non_lidar_dim"], G)
        ral, rbe, rme = _ref_beta(rl, A, shift, BETA_INITIAL_SCALE)
        return rl, rv, ral, rbe, rme, rha, rhc

    ref1 = ref_step(x1, h0, h0)
    ref2 = ref_step(x2, ref1[5], ref1[6])

    names = ("logits", "value", "alpha", "beta", "action_mean", "h_actor", "h_critic")
    tol = dict(rtol=5e-2, atol=5e-2)                  # bf16-weight tolerance
    for step_i, (got, want) in enumerate(((step1, ref1), (step2, ref2)), start=1):
        for name, gv, wv in zip(names, got, want):
            err = float(jnp.max(jnp.abs(gv - wv)))
            assert bool(jnp.allclose(gv, wv, **tol)), \
                f"step{step_i} {name} mismatch (max abs err {err:.3e})"

    print("KERNEL_OK")
</pallas_src>

<mosaic_0001>
module attributes {stable_mosaic.version = 11 : i64} {
  func.func @_fused_kernel(%arg0: i32, %arg1: memref<16x256xbf16, #tpu.memory_space<vmem>>, %arg2: memref<816x512xbf16, #tpu.memory_space<vmem>>, %arg3: memref<16x256xf32, #tpu.memory_space<vmem>>) attributes {dimension_semantics = [#tpu.dimension_semantics<parallel>], iteration_bounds = array<i64: 1>, scalar_prefetch = 0 : i64, scratch_operands = 0 : i64, tpu.core_type = #tpu.core_type<tc>, window_params = [{transform_indices = @transform_0, window_bounds = array<i64: 16, 256>}, {pipeline_mode = #tpu.pipeline_mode<synchronous>, transform_indices = @transform_1, window_bounds = array<i64: 816, 512>}, {transform_indices = @transform_2, window_bounds = array<i64: 16, 256>}]} {
    %c0 = arith.constant 0 : index
    %c0_0 = arith.constant 0 : index
    %0 = vector.load %arg2[%c0, %c0_0] : memref<816x512xbf16, #tpu.memory_space<vmem>>, vector<128x512xbf16>
    %c128 = arith.constant 128 : index
    %c0_1 = arith.constant 0 : index
    %1 = vector.load %arg2[%c128, %c0_1] : memref<816x512xbf16, #tpu.memory_space<vmem>>, vector<128x256xbf16>
    %c256 = arith.constant 256 : index
    %c0_2 = arith.constant 0 : index
    %2 = vector.load %arg2[%c256, %c0_2] : memref<816x512xbf16, #tpu.memory_space<vmem>>, vector<128x128xbf16>
    %c384 = arith.constant 384 : index
    %c0_3 = arith.constant 0 : index
    %3 = vector.load %arg2[%c384, %c0_3] : memref<816x512xbf16, #tpu.memory_space<vmem>>, vector<128x128xbf16>
    %c512 = arith.constant 512 : index
    %c0_4 = arith.constant 0 : index
    %4 = vector.load %arg2[%c512, %c0_4] : memref<816x512xbf16, #tpu.memory_space<vmem>>, vector<128x128xbf16>
    %c640 = arith.constant 640 : index
    %c0_5 = arith.constant 0 : index
    %5 = vector.load %arg2[%c640, %c0_5] : memref<816x512xbf16, #tpu.memory_space<vmem>>, vector<128x128xbf16>
    %c768 = arith.constant 768 : index
    %c0_6 = arith.constant 0 : index
    %6 = vector.load %arg2[%c768, %c0_6] : memref<816x512xbf16, #tpu.memory_space<vmem>>, vector<1x512xbf16>
    %7 = arith.extf %6 : vector<1x512xbf16> to vector<1x512xf32>
    %c776 = arith.constant 776 : index
    %c0_7 = arith.constant 0 : index
    %8 = vector.load %arg2[%c776, %c0_7] : memref<816x512xbf16, #tpu.memory_space<vmem>>, vector<1x256xbf16>
    %9 = arith.extf %8 : vector<1x256xbf16> to vector<1x256xf32>
    %c784 = arith.constant 784 : index
    %c0_8 = arith.constant 0 : index
    %10 = vector.load %arg2[%c784, %c0_8] : memref<816x512xbf16, #tpu.memory_space<vmem>>, vector<1x128xbf16>
    %11 = arith.extf %10 : vector<1x128xbf16> to vector<1x128xf32>
    %c792 = arith.constant 792 : index
    %c0_9 = arith.constant 0 : index
    %12 = vector.load %arg2[%c792, %c0_9] : memref<816x512xbf16, #tpu.memory_space<vmem>>, vector<1x128xbf16>
    %13 = arith.extf %12 : vector<1x128xbf16> to vector<1x128xf32>
    %c800 = arith.constant 800 : index
    %c0_10 = arith.constant 0 : index
    %14 = vector.load %arg2[%c800, %c0_10] : memref<816x512xbf16, #tpu.memory_space<vmem>>, vector<1x128xbf16>
    %15 = arith.extf %14 : vector<1x128xbf16> to vector<1x128xf32>
    %c808 = arith.constant 808 : index
    %c0_11 = arith.constant 0 : index
    %16 = vector.load %arg2[%c808, %c0_11] : memref<816x512xbf16, #tpu.memory_space<vmem>>, vector<1x128xbf16>
    %17 = arith.extf %16 : vector<1x128xbf16> to vector<1x128xf32>
    %c0_12 = arith.constant 0 : index
    %c0_13 = arith.constant 0 : index
    %18 = vector.load %arg1[%c0_12, %c0_13] : memref<16x256xbf16, #tpu.memory_space<vmem>>, vector<16x256xbf16>
    %19 = vector.extract_strided_slice %18 {offsets = [0, 0], sizes = [16, 128], strides = [1, 1]} : vector<16x256xbf16> to vector<16x128xbf16>
    %20 = vector.extract_strided_slice %18 {offsets = [0, 128], sizes = [16, 128], strides = [1, 1]} : vector<16x256xbf16> to vector<16x128xbf16>
    %21 = arith.extf %20 : vector<16x128xbf16> to vector<16x128xf32>
    %cst = arith.constant dense<0.000000e+00> : vector<16x256xf32>
    %22 = tpu.matmul %19, %1, %cst {dimension_numbers = #tpu.dot_dimension_numbers<[1], [0], [0], [1], [0, 0, 1, 1], [], []>} : vector<16x128xbf16>, vector<128x256xbf16>, vector<16x256xf32> -> vector<16x256xf32>
    %23 = vector.broadcast %9 : vector<1x256xf32> to vector<16x256xf32>
    %24 = arith.addf %22, %23 : vector<16x256xf32>
    %cst_14 = arith.constant 0.000000e+00 : f32
    %25 = vector.broadcast %cst_14 : f32 to vector<16x256xf32>
    %26 = arith.cmpf ogt, %24, %25 : vector<16x256xf32>
    %cst_15 = arith.constant 0.000000e+00 : f32
    %27 = vector.broadcast %cst_15 : f32 to vector<16x256xf32>
    %28 = arith.minimumf %24, %27 : vector<16x256xf32>
    %29 = math.exp %28 : vector<16x256xf32>
    %cst_16 = arith.constant 1.000000e+00 : f32
    %30 = vector.broadcast %cst_16 : f32 to vector<16x256xf32>
    %31 = arith.subf %29, %30 : vector<16x256xf32>
    %32 = arith.select %26, %24, %31 : vector<16x256xi1>, vector<16x256xf32>
    %33 = vector.extract_strided_slice %32 {offsets = [0, 0], sizes = [16, 128], strides = [1, 1]} : vector<16x256xf32> to vector<16x128xf32>
    %34 = vector.extract_strided_slice %32 {offsets = [0, 128], sizes = [16, 128], strides = [1, 1]} : vector<16x256xf32> to vector<16x128xf32>
    %35 = arith.truncf %33 : vector<16x128xf32> to vector<16x128xbf16>
    %cst_17 = arith.constant dense<0.000000e+00> : vector<16x128xf32>
    %36 = tpu.matmul %35, %2, %cst_17 {dimension_numbers = #tpu.dot_dimension_numbers<[1], [0], [0], [1], [0, 0, 1, 1], [], []>} : vector<16x128xbf16>, vector<128x128xbf16>, vector<16x128xf32> -> vector<16x128xf32>
    %37 = vector.broadcast %11 : vector<1x128xf32> to vector<16x128xf32>
    %38 = arith.addf %36, %37 : vector<16x128xf32>
    %cst_18 = arith.constant 0.000000e+00 : f32
    %39 = vector.broadcast %cst_18 : f32 to vector<16x128xf32>
    %40 = arith.cmpf ogt, %38, %39 : vector<16x128xf32>
    %cst_19 = arith.constant 0.000000e+00 : f32
    %41 = vector.broadcast %cst_19 : f32 to vector<16x128xf32>
    %42 = arith.minimumf %38, %41 : vector<16x128xf32>
    %43 = math.exp %42 : vector<16x128xf32>
    %cst_20 = arith.constant 1.000000e+00 : f32
    %44 = vector.broadcast %cst_20 : f32 to vector<16x128xf32>
    %45 = arith.subf %43, %44 : vector<16x128xf32>
    %46 = arith.select %40, %38, %45 : vector<16x128xi1>, vector<16x128xf32>
    %47 = arith.addf %46, %21 : vector<16x128xf32>
    %48 = arith.truncf %47 : vector<16x128xf32> to vector<16x128xbf16>
    %cst_21 = arith.constant dense<0.000000e+00> : vector<16x512xf32>
    %49 = tpu.matmul %48, %0, %cst_21 {dimension_numbers = #tpu.dot_dimension_numbers<[1], [0], [0], [1], [0, 0, 1, 1], [], []>} : vector<16x128xbf16>, vector<128x512xbf16>, vector<16x512xf32> -> vector<16x512xf32>
    %50 = vector.broadcast %7 : vector<1x512xf32> to vector<16x512xf32>
    %51 = arith.addf %49, %50 : vector<16x512xf32>
    %52 = vector.extract_strided_slice %51 {offsets = [0, 0], sizes = [16, 128], strides = [1, 1]} : vector<16x512xf32> to vector<16x128xf32>
    %cst_22 = arith.constant 5.000000e-01 : f32
    %53 = vector.broadcast %cst_22 : f32 to vector<16x128xf32>
    %54 = arith.mulf %53, %52 : vector<16x128xf32>
    %55 = math.tanh %54 : vector<16x128xf32>
    %cst_23 = arith.constant 1.000000e+00 : f32
    %56 = vector.broadcast %cst_23 : f32 to vector<16x128xf32>
    %57 = arith.addf %55, %56 : vector<16x128xf32>
    %cst_24 = arith.constant 5.000000e-01 : f32
    %58 = vector.broadcast %cst_24 : f32 to vector<16x128xf32>
    %59 = arith.mulf %58, %57 : vector<16x128xf32>
    %60 = vector.extract_strided_slice %51 {offsets = [0, 128], sizes = [16, 128], strides = [1, 1]} : vector<16x512xf32> to vector<16x128xf32>
    %cst_25 = arith.constant 5.000000e-01 : f32
    %61 = vector.broadcast %cst_25 : f32 to vector<16x128xf32>
    %62 = arith.mulf %61, %60 : vector<16x128xf32>
    %63 = math.tanh %62 : vector<16x128xf32>
    %cst_26 = arith.constant 1.000000e+00 : f32
    %64 = vector.broadcast %cst_26 : f32 to vector<16x128xf32>
    %65 = arith.addf %63, %64 : vector<16x128xf32>
    %cst_27 = arith.constant 5.000000e-01 : f32
    %66 = vector.broadcast %cst_27 : f32 to vector<16x128xf32>
    %67 = arith.mulf %66, %65 : vector<16x128xf32>
    %68 = vector.extract_strided_slice %51 {offsets = [0, 256], sizes = [16, 128], strides = [1, 1]} : vector<16x512xf32> to vector<16x128xf32>
    %69 = vector.extract_strided_slice %51 {offsets = [0, 384], sizes = [16, 128], strides = [1, 1]} : vector<16x512xf32> to vector<16x128xf32>
    %70 = arith.mulf %59, %69 : vector<16x128xf32>
    %71 = arith.addf %68, %70 : vector<16x128xf32>
    %72 = math.tanh %71 : vector<16x128xf32>
    %cst_28 = arith.constant 1.000000e+00 : f32
    %73 = vector.broadcast %cst_28 : f32 to vector<16x128xf32>
    %74 = arith.subf %73, %67 : vector<16x128xf32>
    %75 = arith.mulf %74, %72 : vector<16x128xf32>
    %76 = arith.mulf %67, %21 : vector<16x128xf32>
    %77 = arith.addf %75, %76 : vector<16x128xf32>
    %78 = arith.addf %34, %77 : vector<16x128xf32>
    %79 = arith.truncf %78 : vector<16x128xf32> to vector<16x128xbf16>
    %cst_29 = arith.constant dense<0.000000e+00> : vector<16x128xf32>
    %80 = tpu.matmul %79, %3, %cst_29 {dimension_numbers = #tpu.dot_dimension_numbers<[1], [0], [0], [1], [0, 0, 1, 1], [], []>} : vector<16x128xbf16>, vector<128x128xbf16>, vector<16x128xf32> -> vector<16x128xf32>
    %81 = vector.broadcast %13 : vector<1x128xf32> to vector<16x128xf32>
    %82 = arith.addf %80, %81 : vector<16x128xf32>
    %cst_30 = arith.constant 0.000000e+00 : f32
    %83 = vector.broadcast %cst_30 : f32 to vector<16x128xf32>
    %84 = arith.cmpf ogt, %82, %83 : vector<16x128xf32>
    %cst_31 = arith.constant 0.000000e+00 : f32
    %85 = vector.broadcast %cst_31 : f32 to vector<16x128xf32>
    %86 = arith.minimumf %82, %85 : vector<16x128xf32>
    %87 = math.exp %86 : vector<16x128xf32>
    %cst_32 = arith.constant 1.000000e+00 : f32
    %88 = vector.broadcast %cst_32 : f32 to vector<16x128xf32>
    %89 = arith.subf %87, %88 : vector<16x128xf32>
    %90 = arith.select %84, %82, %89 : vector<16x128xi1>, vector<16x128xf32>
    %91 = arith.truncf %90 : vector<16x128xf32> to vector<16x128xbf16>
    %cst_33 = arith.constant dense<0.000000e+00> : vector<16x128xf32>
    %92 = tpu.matmul %91, %4, %cst_33 {dimension_numbers = #tpu.dot_dimension_numbers<[1], [0], [0], [1], [0, 0, 1, 1], [], []>} : vector<16x128xbf16>, vector<128x128xbf16>, vector<16x128xf32> -> vector<16x128xf32>
    %93 = vector.broadcast %15 : vector<1x128xf32> to vector<16x128xf32>
    %94 = arith.addf %92, %93 : vector<16x128xf32>
    %cst_34 = arith.constant 0.000000e+00 : f32
    %95 = vector.broadcast %cst_34 : f32 to vector<16x128xf32>
    %96 = arith.cmpf ogt, %94, %95 : vector<16x128xf32>
    %cst_35 = arith.constant 0.000000e+00 : f32
    %97 = vector.broadcast %cst_35 : f32 to vector<16x128xf32>
    %98 = arith.minimumf %94, %97 : vector<16x128xf32>
    %99 = math.exp %98 : vector<16x128xf32>
    %cst_36 = arith.constant 1.000000e+00 : f32
    %100 = vector.broadcast %cst_36 : f32 to vector<16x128xf32>
    %101 = arith.subf %99, %100 : vector<16x128xf32>
    %102 = arith.select %96, %94, %101 : vector<16x128xi1>, vector<16x128xf32>
    %103 = arith.truncf %102 : vector<16x128xf32> to vector<16x128xbf16>
    %cst_37 = arith.constant dense<0.000000e+00> : vector<16x128xf32>
    %104 = tpu.matmul %103, %5, %cst_37 {dimension_numbers = #tpu.dot_dimension_numbers<[1], [0], [0], [1], [0, 0, 1, 1], [], []>} : vector<16x128xbf16>, vector<128x128xbf16>, vector<16x128xf32> -> vector<16x128xf32>
    %105 = vector.broadcast %17 : vector<1x128xf32> to vector<16x128xf32>
    %106 = arith.addf %104, %105 : vector<16x128xf32>
    %c0_38 = arith.constant 0 : index
    %c0_39 = arith.constant 0 : index
    %107 = vector.load %arg3[%c0_38, %c0_39] : memref<16x256xf32, #tpu.memory_space<vmem>>, vector<16x128xf32>
    tpu.vector_store %arg3[%c0_38, %c0_39], %106 {strides = array<i32>} : memref<16x256xf32, #tpu.memory_space<vmem>>, vector<16x128xf32>,
    %c0_40 = arith.constant 0 : index
    %c128_41 = arith.constant 128 : index
    %108 = vector.load %arg3[%c0_40, %c128_41] : memref<16x256xf32, #tpu.memory_space<vmem>>, vector<16x128xf32>
    tpu.vector_store %arg3[%c0_40, %c128_41], %77 {strides = array<i32>} : memref<16x256xf32, #tpu.memory_space<vmem>>, vector<16x128xf32>,
    return
  }
  func.func @transform_0(%arg0: i32) -> (i32, i32) {
    %c0_i32 = arith.constant 0 : i32
    %c0_i32_0 = arith.constant 0 : i32
    return %arg0, %c0_i32 : i32, i32
  }
  func.func @transform_1(%arg0: i32) -> (i32, i32) {
    %c0_i32 = arith.constant 0 : i32
    %c0_i32_0 = arith.constant 0 : i32
    %c0_i32_1 = arith.constant 0 : i32
    return %c0_i32, %c0_i32_0 : i32, i32
  }
  func.func @transform_2(%arg0: i32) -> (i32, i32) {
    %c0_i32 = arith.constant 0 : i32
    %c0_i32_0 = arith.constant 0 : i32
    return %arg0, %c0_i32 : i32, i32
  }
}

</mosaic_0001>

<llo_original>
// kernel: actor_critic_forward.1
$region0: #{actor_critic_forward.1}
  #allocation0 [shape = 'u32[]', space=smem, size = 0x4, offset = 0x4, fixed_abs, tag = 'smem constant byte address 0x4 - core index']
  #allocation1 [shape = 'u32[144,128]{1,0:T(1,128)}', space=vmem, size = 0x12000, scoped, tag = 'internal scratch']
  %s0 = inlined_call_operand.vmem [shape: bf16[16,256], index: 0, kind: input, shape index: {}]
  %s1 = inlined_call_operand.hbm [shape: bf16[816,512], index: 1, kind: input, shape index: {}]
  %s2 = inlined_call_operand.vmem [shape: f32[16,256], index: 2, kind: output, shape index: {}]
  %s3 = sld [smem:[#allocation0]]
  $region22: #{actor_critic_forward.1} parent=0
    _
  %s5 = ssub.s32 1, %s3
  %s6 = scalar_select 0, %s5, %s3
  $region1: #{actor_critic_forward.1} parent=0
    #allocation2 [shape = 'u8[835584]{0}', space=vmem, size = 0xcc000, scoped, tag = 'input window, operand 1, single buffered']
    #allocation3 [shape = 's32[1]{0}', space=sflag, size = 0x4, scoped, tag = 'scoped memory for actor_critic_forward.1']
    %7 = vsyncpa [#allocation3], 0
    // Predicated region
    $region2: #{actor_critic_forward.1} parent=1 // pred_check
      _
    $region3: #{actor_critic_forward.1} parent=1 // pred_check_branch
      %9 = sbr.rel (0) target = $region5
    $region4: #{actor_critic_forward.1} parent=1 // pred_region
      _
    $region5: #{actor_critic_forward.1} parent=1 // pred_fallthru
      _
    // Predicated region
    $region6: #{actor_critic_forward.1} parent=1 // pred_check
      _
    $region7: #{actor_critic_forward.1} parent=1 // pred_check_branch
      %11 = sbr.rel (0) target = $region9
    $region8: #{actor_critic_forward.1} parent=1 // pred_region
      %s13 = ssub.s32 26112, 26112
      %14 = vsyncadd [#allocation3], %s13
      %s15 = sshll.u32 [#allocation2], 4
      %s16 = int_to_ptr.vmem [resolvable:$true] %s15
      %21 = dma.hbm_to_vmem [thread:$0]  %s1, 26112, %s16, [#allocation3], 256, 256, 16
    $region9: #{actor_critic_forward.1} parent=1 // pred_fallthru
      _
    // Predicated region
    $region10: #{actor_critic_forward.1} parent=1 // pred_check
      _
    $region11: #{actor_critic_forward.1} parent=1 // pred_check_branch
      %23 = sbr.rel (0) target = $region13
    $region12: #{actor_critic_forward.1} parent=1 // pred_region
      %24 = dma.done [#allocation3], 26112
    $region13: #{actor_critic_forward.1} parent=1 // pred_fallthru
      _
    %v26 = vld [vmem:[#allocation2] sm:$0xff]
    %v27 = vld [vmem:[#allocation2 + $0x8] sm:$0xff]
    %v28 = vld [vmem:[#allocation2 + $0x10] sm:$0xff]
    %v29 = vld [vmem:[#allocation2 + $0x18] sm:$0xff]
    %v30 = vld [vmem:[#allocation2 + $0x20] sm:$0xff]
    %v31 = vld [vmem:[#allocation2 + $0x28] sm:$0xff]
    %v32 = vld [vmem:[#allocation2 + $0x30] sm:$0xff]
    %v33 = vld [vmem:[#allocation2 + $0x38] sm:$0xff]
    %v34 = vld [vmem:[#allocation2 + $0x40] sm:$0xff]
    %v35 = vld [vmem:[#allocation2 + $0x48] sm:$0xff]
    %v36 = vld [vmem:[#allocation2 + $0x50] sm:$0xff]
    %v37 = vld [vmem:[#allocation2 + $0x58] sm:$0xff]
    %v38 = vld [vmem:[#allocation2 + $0x60] sm:$0xff]
    %v39 = vld [vmem:[#allocation2 + $0x68] sm:$0xff]
    %v40 = vld [vmem:[#allocation2 + $0x70] sm:$0xff]
    %v41 = vld [vmem:[#allocation2 + $0x78] sm:$0xff]
    %v42 = vld [vmem:[#allocation2 + $0x80] sm:$0xff]
    %v43 = vld [vmem:[#allocation2 + $0x88] sm:$0xff]
    %v44 = vld [vmem:[#allocation2 + $0x90] sm:$0xff]
    %v45 = vld [vmem:[#allocation2 + $0x98] sm:$0xff]
    %v46 = vld [vmem:[#allocation2 + $0xa0] sm:$0xff]
    %v47 = vld [vmem:[#allocation2 + $0xa8] sm:$0xff]
    %v48 = vld [vmem:[#allocation2 + $0xb0] sm:$0xff]
    %v49 = vld [vmem:[#allocation2 + $0xb8] sm:$0xff]
    %v50 = vld [vmem:[#allocation2 + $0xc0] sm:$0xff]
    %v51 = vld [vmem:[#allocation2 + $0xc8] sm:$0xff]
    %v52 = vld [vmem:[#allocation2 + $0xd0] sm:$0xff]
    %v53 = vld [vmem:[#allocation2 + $0xd8] sm:$0xff]
    %v54 = vld [vmem:[#allocation2 + $0xe0] sm:$0xff]
    %v55 = vld [vmem:[#allocation2 + $0xe8] sm:$0xff]
    %v56 = vld [vmem:[#allocation2 + $0xf0] sm:$0xff]
    %v57 = vld [vmem:[#allocation2 + $0xf8] sm:$0xff]
    %v58 = vld [vmem:[#allocation2 + $0x100] sm:$0xff]
    %v59 = vld [vmem:[#allocation2 + $0x110] sm:$0xff]
    %v60 = vld [vmem:[#allocation2 + $0x120] sm:$0xff]
    %v61 = vld [vmem:[#allocation2 + $0x130] sm:$0xff]
    %v62 = vld [vmem:[#allocation2 + $0x140] sm:$0xff]
    %v63 = vld [vmem:[#allocation2 + $0x150] sm:$0xff]
    %v64 = vld [vmem:[#allocation2 + $0x160] sm:$0xff]
    %v65 = vld [vmem:[#allocation2 + $0x170] sm:$0xff]
    %v66 = vld [vmem:[#allocation2 + $0x180] sm:$0xff]
    %v67 = vld [vmem:[#allocation2 + $0x190] sm:$0xff]
    %v68 = vld [vmem:[#allocation2 + $0x1a0] sm:$0xff]
    %v69 = vld [vmem:[#allocation2 + $0x1b0] sm:$0xff]
    %v70 = vld [vmem:[#allocation2 + $0x1c0] sm:$0xff]
    %v71 = vld [vmem:[#allocation2 + $0x1d0] sm:$0xff]
    %v72 = vld [vmem:[#allocation2 + $0x1e0] sm:$0xff]
    %v73 = vld [vmem:[#allocation2 + $0x1f0] sm:$0xff]
    %v74 = vld [vmem:[#allocation2 + $0x200] sm:$0xf]
    %v75 = vld [vmem:[#allocation2 + $0x210] sm:$0xf]
    %v76 = vld [vmem:[#allocation2 + $0x220] sm:$0xf]
    %v77 = vld [vmem:[#allocation2 + $0x230] sm:$0xf]
    %v78 = vld [vmem:[#allocation2 + $0x240] sm:$0xf]
    %v79 = vld [vmem:[#allocation2 + $0x250] sm:$0xf]
    %v80 = vld [vmem:[#allocation2 + $0x260] sm:$0xf]
    %v81 = vld [vmem:[#allocation2 + $0x270] sm:$0xf]
    %v82 = vld [vmem:[#allocation2 + $0x280] sm:$0xf]
    %v83 = vld [vmem:[#allocation2 + $0x290] sm:$0xf]
    %v84 = vld [vmem:[#allocation2 + $0x2a0] sm:$0xf]
    %v85 = vld [vmem:[#allocation2 + $0x2b0] sm:$0xf]
    %v86 = vld [vmem:[#allocation2 + $0x2c0] sm:$0xf]
    %v87 = vld [vmem:[#allocation2 + $0x2d0] sm:$0xf]
    %v88 = vld [vmem:[#allocation2 + $0x2e0] sm:$0xf]
    %v89 = vld [vmem:[#allocation2 + $0x2f0] sm:$0xf]
    %v90 = vld [vmem:[#allocation2 + $0x300] sm:$0xf]
    %v91 = vld [vmem:[#allocation2 + $0x310] sm:$0xf]
    %v92 = vld [vmem:[#allocation2 + $0x320] sm:$0xf]
    %v93 = vld [vmem:[#allocation2 + $0x330] sm:$0xf]
    %v94 = vld [vmem:[#allocation2 + $0x340] sm:$0xf]
    %v95 = vld [vmem:[#allocation2 + $0x350] sm:$0xf]
    %v96 = vld [vmem:[#allocation2 + $0x360] sm:$0xf]
    %v97 = vld [vmem:[#allocation2 + $0x370] sm:$0xf]
    %v98 = vld [vmem:[#allocation2 + $0x380] sm:$0xf]
    %v99 = vld [vmem:[#allocation2 + $0x390] sm:$0xf]
    %v100 = vld [vmem:[#allocation2 + $0x3a0] sm:$0xf]
    %v101 = vld [vmem:[#allocation2 + $0x3b0] sm:$0xf]
    %v102 = vld [vmem:[#allocation2 + $0x3c0] sm:$0xf]
    %v103 = vld [vmem:[#allocation2 + $0x3d0] sm:$0xf]
    %v104 = vld [vmem:[#allocation2 + $0x3e0] sm:$0xf]
    %v105 = vld [vmem:[#allocation2 + $0x3f0] sm:$0xf]
    %v106 = vld [vmem:[#allocation2 + $0x400] sm:$0xf]
    %v107 = vld [vmem:[#allocation2 + $0x410] sm:$0xf]
    %v108 = vld [vmem:[#allocation2 + $0x420] sm:$0xf]
    %v109 = vld [vmem:[#allocation2 + $0x430] sm:$0xf]
    %v110 = vld [vmem:[#allocation2 + $0x440] sm:$0xf]
    %v111 = vld [vmem:[#allocation2 + $0x450] sm:$0xf]
    %v112 = vld [vmem:[#allocation2 + $0x460] sm:$0xf]
    %v113 = vld [vmem:[#allocation2 + $0x470] sm:$0xf]
    %v114 = vld [vmem:[#allocation2 + $0x480] sm:$0xf]
    %v115 = vld [vmem:[#allocation2 + $0x490] sm:$0xf]
    %v116 = vld [vmem:[#allocation2 + $0x4a0] sm:$0xf]
    %v117 = vld [vmem:[#allocation2 + $0x4b0] sm:$0xf]
    %v118 = vld [vmem:[#allocation2 + $0x4c0] sm:$0xf]
    %v119 = vld [vmem:[#allocation2 + $0x4d0] sm:$0xf]
    %v120 = vld [vmem:[#allocation2 + $0x4e0] sm:$0xf]
    %v121 = vld [vmem:[#allocation2 + $0x4f0] sm:$0xf]
    %v122 = vld [vmem:[#allocation2 + $0x500] sm:$0xf]
    %v123 = vld [vmem:[#allocation2 + $0x510] sm:$0xf]
    %v124 = vld [vmem:[#allocation2 + $0x520] sm:$0xf]
    %v125 = vld [vmem:[#allocation2 + $0x530] sm:$0xf]
    %v126 = vld [vmem:[#allocation2 + $0x540] sm:$0xf]
    %v127 = vld [vmem:[#allocation2 + $0x550] sm:$0xf]
    %v128 = vld [vmem:[#allocation2 + $0x560] sm:$0xf]
    %v129 = vld [vmem:[#allocation2 + $0x570] sm:$0xf]
    %v130 = vld [vmem:[#allocation2 + $0x580] sm:$0xf]
    %v131 = vld [vmem:[#allocation2 + $0x590] sm:$0xf]
    %v132 = vld [vmem:[#allocation2 + $0x5a0] sm:$0xf]
    %v133 = vld [vmem:[#allocation2 + $0x5b0] sm:$0xf]
    %v134 = vld [vmem:[#allocation2 + $0x5c0] sm:$0xf]
    %v135 = vld [vmem:[#allocation2 + $0x5d0] sm:$0xf]
    %v136 = vld [vmem:[#allocation2 + $0x5e0] sm:$0xf]
    %v137 = vld [vmem:[#allocation2 + $0x5f0] sm:$0xf]
    %v138 = vld [vmem:[#allocation2 + $0x600] sm:$0x11]
    %v139 = vld [vmem:[#allocation2 + $0x608] sm:$0x11]
    %v140 = vunpack.c.l.bf16 %v138
    %v141 = vunpack.c.h.bf16 %v138
    %v142 = vunpack.c.l.bf16 %v139
    %v143 = vunpack.c.h.bf16 %v139
    %v144 = vld [vmem:[#allocation2 + $0x610] sm:$0x11]
    %v145 = vunpack.c.l.bf16 %v144
    %v146 = vunpack.c.h.bf16 %v144
    %v147 = vld [vmem:[#allocation2 + $0x620] sm:$0x1]
    %v148 = vunpack.c.l.bf16 %v147
    %v149 = vld [vmem:[#allocation2 + $0x630] sm:$0x1]
    %v150 = vunpack.c.l.bf16 %v149
    %v151 = vld [vmem:[#allocation2 + $0x640] sm:$0x1]
    %v152 = vunpack.c.l.bf16 %v151
    %v153 = vld [vmem:[#allocation2 + $0x650] sm:$0x1]
    %v154 = vunpack.c.l.bf16 %v153
    %v155 = vld [vmem:[%s0] sm:$0xff]
    %v156 = vld [vmem:[%s0 + $0x8] sm:$0xff]
    %v159 = vrot.slane %v155, 4
    %v160 = vrot.slane %v156, 4
    %v163 = vunpack.c.l.bf16 %v159
    %v164 = vunpack.c.l.bf16 %v160
    %v165 = vlaneseq
    %v166 = vshrl.u32 %v165, 7
    %v167 = vsub.s32 0, %v166
    %v168 = vrot.slane %v145, %v167
    %v169 = vlaneseq
    %v170 = vshrl.u32 %v169, 7
    %v171 = vsub.s32 0, %v170
    %v172 = vrot.slane %v146, %v171
    %v173 = vunpack.c.l.b16 %v155
    %v174 = vunpack.c.l.b16 %v156
    %v175 = vpack.c.b16 %v174, %v173
    %v193 = vunpack.c.l.b16 %v58
    %v194 = vunpack.c.h.b16 %v58
    %v195 = vunpack.c.l.b16 %v59
    %v196 = vunpack.c.h.b16 %v59
    %v197 = vunpack.c.l.b16 %v60
    %v198 = vunpack.c.h.b16 %v60
    %v199 = vunpack.c.l.b16 %v61
    %v200 = vunpack.c.h.b16 %v61
    %v201 = vunpack.c.l.b16 %v62
    %v202 = vunpack.c.h.b16 %v62
    %v203 = vunpack.c.l.b16 %v63
    %v204 = vunpack.c.h.b16 %v63
    %v205 = vunpack.c.l.b16 %v64
    %v206 = vunpack.c.h.b16 %v64
    %v207 = vunpack.c.l.b16 %v65
    %v208 = vunpack.c.h.b16 %v65
    %v209 = vunpack.c.l.b16 %v66
    %v210 = vunpack.c.h.b16 %v66
    %v211 = vunpack.c.l.b16 %v67
    %v212 = vunpack.c.h.b16 %v67
    %v213 = vunpack.c.l.b16 %v68
    %v214 = vunpack.c.h.b16 %v68
    %v215 = vunpack.c.l.b16 %v69
    %v216 = vunpack.c.h.b16 %v69
    %v217 = vunpack.c.l.b16 %v70
    %v218 = vunpack.c.h.b16 %v70
    %v219 = vunpack.c.l.b16 %v71
    %v220 = vunpack.c.h.b16 %v71
    %v221 = vunpack.c.l.b16 %v72
    %v222 = vunpack.c.h.b16 %v72
    %v223 = vunpack.c.l.b16 %v73
    %v224 = vunpack.c.h.b16 %v73
    %v225 = vpack.c.b16 %v195, %v193
    %v226 = vpack.c.b16 %v196, %v194
    %v227 = vpack.c.b16 %v199, %v197
    %v228 = vpack.c.b16 %v200, %v198
    %v229 = vpack.c.b16 %v203, %v201
    %v230 = vpack.c.b16 %v204, %v202
    %v231 = vpack.c.b16 %v207, %v205
    %v232 = vpack.c.b16 %v208, %v206
    %v233 = vpack.c.b16 %v211, %v209
    %v234 = vpack.c.b16 %v212, %v210
    %v235 = vpack.c.b16 %v215, %v213
    %v236 = vpack.c.b16 %v216, %v214
    %v237 = vpack.c.b16 %v219, %v217
    %v238 = vpack.c.b16 %v220, %v218
    %v239 = vpack.c.b16 %v223, %v221
    %v240 = vpack.c.b16 %v224, %v222
    %257 = vmatprep.subr.bf16.mxu0 %v240
    %258 = vmatpush1.bf16.msra.mxu0 %v239
    %259 = vmatprep.subr.bf16.mxu0 %v238
    %260 = vmatpush1.bf16.msra.mxu0 %v237
    %261 = vmatprep.subr.bf16.mxu0 %v236
    %262 = vmatpush1.bf16.msra.mxu0 %v235
    %263 = vmatprep.subr.bf16.mxu0 %v234
    %264 = vmatpush1.bf16.msra.mxu0 %v233
    %265 = vmatprep.subr.bf16.mxu0 %v232
    %266 = vmatpush1.bf16.msra.mxu0 %v231
    %267 = vmatprep.subr.bf16.mxu0 %v230
    %268 = vmatpush1.bf16.msra.mxu0 %v229
    %269 = vmatprep.subr.bf16.mxu0 %v228
    %270 = vmatpush1.bf16.msra.mxu0 %v227
    %271 = vmatprep.subr.bf16.mxu0 %v226
    %272 = vmatpush1.bf16.msra.mxu0 %v225
    %273 = vmatprep.subr.bf16.mxu0 0
    %274 = vmatpush2.bf16.msra.mxu0 0
    %275 = vmatprep.subr.bf16.mxu0 0
    %276 = vmatpush2.bf16.msra.mxu0 0
    %277 = vmatprep.subr.bf16.mxu0 0
    %278 = vmatpush2.bf16.msra.mxu0 0
    %279 = vmatprep.subr.bf16.mxu0 0
    %280 = vmatpush2.bf16.msra.mxu0 0
    %281 = vmatprep.subr.bf16.mxu0 0
    %282 = vmatpush2.bf16.msra.mxu0 0
    %283 = vmatprep.subr.bf16.mxu0 0
    %284 = vmatpush2.bf16.msra.mxu0 0
    %285 = vmatprep.subr.bf16.mxu0 0
    %286 = vmatpush2.bf16.msra.mxu0 0
    %287 = vmatprep.subr.bf16.mxu0 0
    %288 = vmatpush2.bf16.msra.mxu0 0
    %289 = vmatprep.mubr.bf16.mxu0 0
    %290 = vmatmul.mubr.bf16.gmra.mxu0 %v175
    %v291 = vpop.f32.mrf.mxu0
    %v292 = vadd.f32 %v168, %v291
    %v293 = vpop.f32.mrf.mxu0
    %v294 = vadd.f32 %v172, %v293
    %v295 = vpop.f32.mrf.mxu0
    %v296 = vadd.f32 %v168, %v295
    %v297 = vpop.f32.mrf.mxu0
    %v298 = vadd.f32 %v172, %v297
    %299 = vdwg.mxu0
    %vm300 = vcmp.gt.f32.partialorder %v292, 0.0
    %vm301 = vcmp.gt.f32.partialorder %v294, 0.0
    %vm302 = vcmp.gt.f32.partialorder %v296, 0.0
    %vm303 = vcmp.gt.f32.partialorder %v298, 0.0
    %v304 = vmin.f32 %v292, 0.0
    %v305 = vmin.f32 %v294, 0.0
    %v306 = vmin.f32 %v296, 0.0
    %v307 = vmin.f32 %v298, 0.0
    %v308 = vmul.f32 %v304, 1.442695
    %v309 = vpow.pop %v308
    %v310 = vmul.f32 %v305, 1.442695
    %v311 = vpow.pop %v310
    %v312 = vmul.f32 %v306, 1.442695
    %v313 = vpow.pop %v312
    %v314 = vmul.f32 %v307, 1.442695
    %v315 = vpow.pop %v314
    %v316 = vsub.f32 %v309, 1.0
    %v317 = vsub.f32 %v311, 1.0
    %v318 = vsub.f32 %v313, 1.0
    %v319 = vsub.f32 %v315, 1.0
    %v320 = vsel %vm300, %v292, %v316
    %v321 = vsel %vm301, %v294, %v317
    %v322 = vsel %vm302, %v296, %v318
    %v323 = vsel %vm303, %v298, %v319
    %v324 = vpack.c.bf16 %v322, %v320
    %v325 = vlaneseq
    %v326 = vshrl.u32 %v325, 7
    %v327 = vsub.s32 0, %v326
    %v328 = vrot.slane %v148, %v327
    %v345 = vunpack.c.l.b16 %v74
    %v346 = vunpack.c.l.b16 %v75
    %v347 = vunpack.c.l.b16 %v76
    %v348 = vunpack.c.l.b16 %v77
    %v349 = vunpack.c.l.b16 %v78
    %v350 = vunpack.c.l.b16 %v79
    %v351 = vunpack.c.l.b16 %v80
    %v352 = vunpack.c.l.b16 %v81
    %v353 = vunpack.c.l.b16 %v82
    %v354 = vunpack.c.l.b16 %v83
    %v355 = vunpack.c.l.b16 %v84
    %v356 = vunpack.c.l.b16 %v85
    %v357 = vunpack.c.l.b16 %v86
    %v358 = vunpack.c.l.b16 %v87
    %v359 = vunpack.c.l.b16 %v88
    %v360 = vunpack.c.l.b16 %v89
    %v361 = vpack.c.b16 %v346, %v345
    %v362 = vpack.c.b16 %v348, %v347
    %v363 = vpack.c.b16 %v350, %v349
    %v364 = vpack.c.b16 %v352, %v351
    %v365 = vpack.c.b16 %v354, %v353
    %v366 = vpack.c.b16 %v356, %v355
    %v367 = vpack.c.b16 %v358, %v357
    %v368 = vpack.c.b16 %v360, %v359
    %377 = vmatprep.subr.bf16.mxu0 0
    %378 = vmatpush1.bf16.msra.mxu0 %v368
    %379 = vmatprep.subr.bf16.mxu0 0
    %380 = vmatpush1.bf16.msra.mxu0 %v367
    %381 = vmatprep.subr.bf16.mxu0 0
    %382 = vmatpush1.bf16.msra.mxu0 %v366
    %383 = vmatprep.subr.bf16.mxu0 0
    %384 = vmatpush1.bf16.msra.mxu0 %v365
    %385 = vmatprep.subr.bf16.mxu0 0
    %386 = vmatpush1.bf16.msra.mxu0 %v364
    %387 = vmatprep.subr.bf16.mxu0 0
    %388 = vmatpush1.bf16.msra.mxu0 %v363
    %389 = vmatprep.subr.bf16.mxu0 0
    %390 = vmatpush1.bf16.msra.mxu0 %v362
    %391 = vmatprep.subr.bf16.mxu0 0
    %392 = vmatpush1.bf16.msra.mxu0 %v361
    %393 = vmatprep.subr.bf16.mxu0 0
    %394 = vmatpush2.bf16.msra.mxu0 0
    %395 = vmatprep.subr.bf16.mxu0 0
    %396 = vmatpush2.bf16.msra.mxu0 0
    %397 = vmatprep.subr.bf16.mxu0 0
    %398 = vmatpush2.bf16.msra.mxu0 0
    %399 = vmatprep.subr.bf16.mxu0 0
    %400 = vmatpush2.bf16.msra.mxu0 0
    %401 = vmatprep.subr.bf16.mxu0 0
    %402 = vmatpush2.bf16.msra.mxu0 0
    %403 = vmatprep.subr.bf16.mxu0 0
    %404 = vmatpush2.bf16.msra.mxu0 0
    %405 = vmatprep.subr.bf16.mxu0 0
    %406 = vmatpush2.bf16.msra.mxu0 0
    %407 = vmatprep.subr.bf16.mxu0 0
    %408 = vmatpush2.bf16.msra.mxu0 0
    %409 = vmatprep.mubr.bf16.mxu0 0
    %410 = vmatmul.mubr.bf16.gmra.mxu0 %v324
    %v411 = vpop.f32.mrf.mxu0
    %v412 = vadd.f32 %v328, %v411
    %v413 = vpop.f32.mrf.mxu0
    %v414 = vpop.f32.mrf.mxu0
    %v415 = vadd.f32 %v328, %v414
    %v416 = vpop.f32.mrf.mxu0
    %417 = vdwg.mxu0
    %vm418 = vcmp.gt.f32.partialorder %v412, 0.0
    %vm419 = vcmp.gt.f32.partialorder %v415, 0.0
    %v420 = vmin.f32 %v412, 0.0
    %v421 = vmin.f32 %v415, 0.0
    %v422 = vmul.f32 %v420, 1.442695
    %v423 = vpow.pop %v422
    %v424 = vmul.f32 %v421, 1.442695
    %v425 = vpow.pop %v424
    %v426 = vsub.f32 %v423, 1.0
    %v427 = vsub.f32 %v425, 1.0
    %v428 = vsel %vm418, %v412, %v426
    %v429 = vsel %vm419, %v415, %v427
    %v430 = vadd.f32 %v428, %v163
    %v431 = vadd.f32 %v429, %v164
    %v432 = vpack.c.bf16 %v431, %v430
    %v433 = vlaneseq
    %v434 = vshrl.u32 %v433, 7
    %v435 = vsub.s32 0, %v434
    %v436 = vrot.slane %v140, %v435
    %v437 = vlaneseq
    %v438 = vshrl.u32 %v437, 7
    %v439 = vsub.s32 0, %v438
    %v440 = vrot.slane %v141, %v439
    %v441 = vlaneseq
    %v442 = vshrl.u32 %v441, 7
    %v443 = vsub.s32 0, %v442
    %v444 = vrot.slane %v142, %v443
    %v445 = vlaneseq
    %v446 = vshrl.u32 %v445, 7
    %v447 = vsub.s32 0, %v446
    %v448 = vrot.slane %v143, %v447
    %v481 = vunpack.c.l.b16 %v26
    %v482 = vunpack.c.h.b16 %v26
    %v483 = vunpack.c.l.b16 %v27
    %v484 = vunpack.c.h.b16 %v27
    %v485 = vunpack.c.l.b16 %v28
    %v486 = vunpack.c.h.b16 %v28
    %v487 = vunpack.c.l.b16 %v29
    %v488 = vunpack.c.h.b16 %v29
    %v489 = vunpack.c.l.b16 %v30
    %v490 = vunpack.c.h.b16 %v30
    %v491 = vunpack.c.l.b16 %v31
    %v492 = vunpack.c.h.b16 %v31
    %v493 = vunpack.c.l.b16 %v32
    %v494 = vunpack.c.h.b16 %v32
    %v495 = vunpack.c.l.b16 %v33
    %v496 = vunpack.c.h.b16 %v33
    %v497 = vunpack.c.l.b16 %v34
    %v498 = vunpack.c.h.b16 %v34
    %v499 = vunpack.c.l.b16 %v35
    %v500 = vunpack.c.h.b16 %v35
    %v501 = vunpack.c.l.b16 %v36
    %v502 = vunpack.c.h.b16 %v36
    %v503 = vunpack.c.l.b16 %v37
    %v504 = vunpack.c.h.b16 %v37
    %v505 = vunpack.c.l.b16 %v38
    %v506 = vunpack.c.h.b16 %v38
    %v507 = vunpack.c.l.b16 %v39
    %v508 = vunpack.c.h.b16 %v39
    %v509 = vunpack.c.l.b16 %v40
    %v510 = vunpack.c.h.b16 %v40
    %v511 = vunpack.c.l.b16 %v41
    %v512 = vunpack.c.h.b16 %v41
    %v513 = vunpack.c.l.b16 %v42
    %v514 = vunpack.c.h.b16 %v42
    %v515 = vunpack.c.l.b16 %v43
    %v516 = vunpack.c.h.b16 %v43
    %v517 = vunpack.c.l.b16 %v44
    %v518 = vunpack.c.h.b16 %v44
    %v519 = vunpack.c.l.b16 %v45
    %v520 = vunpack.c.h.b16 %v45
    %v521 = vunpack.c.l.b16 %v46
    %v522 = vunpack.c.h.b16 %v46
    %v523 = vunpack.c.l.b16 %v47
    %v524 = vunpack.c.h.b16 %v47
    %v525 = vunpack.c.l.b16 %v48
    %v526 = vunpack.c.h.b16 %v48
    %v527 = vunpack.c.l.b16 %v49
    %v528 = vunpack.c.h.b16 %v49
    %v529 = vunpack.c.l.b16 %v50
    %v530 = vunpack.c.h.b16 %v50
    %v531 = vunpack.c.l.b16 %v51
    %v532 = vunpack.c.h.b16 %v51
    %v533 = vunpack.c.l.b16 %v52
    %v534 = vunpack.c.h.b16 %v52
    %v535 = vunpack.c.l.b16 %v53
    %v536 = vunpack.c.h.b16 %v53
    %v537 = vunpack.c.l.b16 %v54
    %v538 = vunpack.c.h.b16 %v54
    %v539 = vunpack.c.l.b16 %v55
    %v540 = vunpack.c.h.b16 %v55
    %v541 = vunpack.c.l.b16 %v56
    %v542 = vunpack.c.h.b16 %v56
    %v543 = vunpack.c.l.b16 %v57
    %v544 = vunpack.c.h.b16 %v57
    %v545 = vpack.c.b16 %v485, %v481
    %v546 = vpack.c.b16 %v486, %v482
    %v547 = vpack.c.b16 %v487, %v483
    %v548 = vpack.c.b16 %v488, %v484
    %v549 = vpack.c.b16 %v493, %v489
    %v550 = vpack.c.b16 %v494, %v490
    %v551 = vpack.c.b16 %v495, %v491
    %v552 = vpack.c.b16 %v496, %v492
    %v553 = vpack.c.b16 %v501, %v497
    %v554 = vpack.c.b16 %v502, %v498
    %v555 = vpack.c.b16 %v503, %v499
    %v556 = vpack.c.b16 %v504, %v500
    %v557 = vpack.c.b16 %v509, %v505
    %v558 = vpack.c.b16 %v510, %v506
    %v559 = vpack.c.b16 %v511, %v507
    %v560 = vpack.c.b16 %v512, %v508
    %v561 = vpack.c.b16 %v517, %v513
    %v562 = vpack.c.b16 %v518, %v514
    %v563 = vpack.c.b16 %v519, %v515
    %v564 = vpack.c.b16 %v520, %v516
    %v565 = vpack.c.b16 %v525, %v521
    %v566 = vpack.c.b16 %v526, %v522
    %v567 = vpack.c.b16 %v527, %v523
    %v568 = vpack.c.b16 %v528, %v524
    %v569 = vpack.c.b16 %v533, %v529
    %v570 = vpack.c.b16 %v534, %v530
    %v571 = vpack.c.b16 %v535, %v531
    %v572 = vpack.c.b16 %v536, %v532
    %v573 = vpack.c.b16 %v541, %v537
    %v574 = vpack.c.b16 %v542, %v538
    %v575 = vpack.c.b16 %v543, %v539
    %v576 = vpack.c.b16 %v544, %v540
    %609 = vmatprep.subr.bf16.mxu0 %v574
    %610 = vmatpush1.bf16.msra.mxu0 %v573
    %611 = vmatprep.subr.bf16.mxu0 %v570
    %612 = vmatpush1.bf16.msra.mxu0 %v569
    %613 = vmatprep.subr.bf16.mxu0 %v566
    %614 = vmatpush1.bf16.msra.mxu0 %v565
    %615 = vmatprep.subr.bf16.mxu0 %v562
    %616 = vmatpush1.bf16.msra.mxu0 %v561
    %617 = vmatprep.subr.bf16.mxu0 %v558
    %618 = vmatpush1.bf16.msra.mxu0 %v557
    %619 = vmatprep.subr.bf16.mxu0 %v554
    %620 = vmatpush1.bf16.msra.mxu0 %v553
    %621 = vmatprep.subr.bf16.mxu0 %v550
    %622 = vmatpush1.bf16.msra.mxu0 %v549
    %623 = vmatprep.subr.bf16.mxu0 %v546
    %624 = vmatpush1.bf16.msra.mxu0 %v545
    %625 = vmatprep.subr.bf16.mxu0 0
    %626 = vmatpush2.bf16.msra.mxu0 0
    %627 = vmatprep.subr.bf16.mxu0 0
    %628 = vmatpush2.bf16.msra.mxu0 0
    %629 = vmatprep.subr.bf16.mxu0 0
    %630 = vmatpush2.bf16.msra.mxu0 0
    %631 = vmatprep.subr.bf16.mxu0 0
    %632 = vmatpush2.bf16.msra.mxu0 0
    %633 = vmatprep.subr.bf16.mxu0 0
    %634 = vmatpush2.bf16.msra.mxu0 0
    %635 = vmatprep.subr.bf16.mxu0 0
    %636 = vmatpush2.bf16.msra.mxu0 0
    %637 = vmatprep.subr.bf16.mxu0 0
    %638 = vmatpush2.bf16.msra.mxu0 0
    %639 = vmatprep.subr.bf16.mxu0 0
    %640 = vmatpush2.bf16.msra.mxu0 0
    %641 = vmatprep.mubr.bf16.mxu0 0
    %642 = vmatmul.mubr.bf16.gmra.mxu0 %v432
    %v643 = vpop.f32.mrf.mxu0
    %v644 = vadd.f32 %v436, %v643
    %v645 = vpop.f32.mrf.mxu0
    %v646 = vadd.f32 %v440, %v645
    %v647 = vpop.f32.mrf.mxu0
    %v648 = vadd.f32 %v436, %v647
    %v649 = vpop.f32.mrf.mxu0
    %v650 = vadd.f32 %v440, %v649
    %651 = vdwg.mxu0
    %652 = vmatprep.subr.bf16.mxu0 %v576
    %653 = vmatpush1.bf16.msra.mxu0 %v575
    %654 = vmatprep.subr.bf16.mxu0 %v572
    %655 = vmatpush1.bf16.msra.mxu0 %v571
    %656 = vmatprep.subr.bf16.mxu0 %v568
    %657 = vmatpush1.bf16.msra.mxu0 %v567
    %658 = vmatprep.subr.bf16.mxu0 %v564
    %659 = vmatpush1.bf16.msra.mxu0 %v563
    %660 = vmatprep.subr.bf16.mxu0 %v560
    %661 = vmatpush1.bf16.msra.mxu0 %v559
    %662 = vmatprep.subr.bf16.mxu0 %v556
    %663 = vmatpush1.bf16.msra.mxu0 %v555
    %664 = vmatprep.subr.bf16.mxu0 %v552
    %665 = vmatpush1.bf16.msra.mxu0 %v551
    %666 = vmatprep.subr.bf16.mxu0 %v548
    %667 = vmatpush1.bf16.msra.mxu0 %v547
    %668 = vmatprep.subr.bf16.mxu0 0
    %669 = vmatpush2.bf16.msra.mxu0 0
    %670 = vmatprep.subr.bf16.mxu0 0
    %671 = vmatpush2.bf16.msra.mxu0 0
    %672 = vmatprep.subr.bf16.mxu0 0
    %673 = vmatpush2.bf16.msra.mxu0 0
    %674 = vmatprep.subr.bf16.mxu0 0
    %675 = vmatpush2.bf16.msra.mxu0 0
    %676 = vmatprep.subr.bf16.mxu0 0
    %677 = vmatpush2.bf16.msra.mxu0 0
    %678 = vmatprep.subr.bf16.mxu0 0
    %679 = vmatpush2.bf16.msra.mxu0 0
    %680 = vmatprep.subr.bf16.mxu0 0
    %681 = vmatpush2.bf16.msra.mxu0 0
    %682 = vmatprep.subr.bf16.mxu0 0
    %683 = vmatpush2.bf16.msra.mxu0 0
    %684 = vmatprep.mubr.bf16.mxu0 0
    %685 = vmatmul.mubr.bf16.gmra.mxu0 %v432
    %v686 = vpop.f32.mrf.mxu0
    %v687 = vadd.f32 %v444, %v686
    %v688 = vpop.f32.mrf.mxu0
    %v689 = vadd.f32 %v448, %v688
    %v690 = vpop.f32.mrf.mxu0
    %v691 = vadd.f32 %v444, %v690
    %v692 = vpop.f32.mrf.mxu0
    %v693 = vadd.f32 %v448, %v692
    %694 = vdwg.mxu0
    %v695 = vmul.f32 %v644, 0.5
    %v696 = vmul.f32 %v648, 0.5
    %v697 = vtanh.pop %v695
    %v698 = vtanh.pop %v696
    %v699 = vadd.f32 %v697, 1.0
    %v700 = vadd.f32 %v698, 1.0
    %v701 = vmul.f32 %v699, 0.5
    %v702 = vmul.f32 %v700, 0.5
    %v703 = vmul.f32 %v646, 0.5
    %v704 = vmul.f32 %v650, 0.5
    %v705 = vtanh.pop %v703
    %v706 = vtanh.pop %v704
    %v707 = vadd.f32 %v705, 1.0
    %v708 = vadd.f32 %v706, 1.0
    %v709 = vmul.f32 %v707, 0.5
    %v710 = vmul.f32 %v708, 0.5
    %v711 = vmul.f32 %v701, %v689
    %v712 = vmul.f32 %v702, %v693
    %v713 = vadd.f32 %v687, %v711
    %v714 = vadd.f32 %v691, %v712
    %v715 = vtanh.pop %v713
    %v716 = vtanh.pop %v714
    %v717 = vsub.f32 1.0, %v709
    %v718 = vsub.f32 1.0, %v710
    %v719 = vmul.f32 %v717, %v715
    %v720 = vmul.f32 %v718, %v716
    %v721 = vmul.f32 %v709, %v163
    %v722 = vmul.f32 %v710, %v164
    %v723 = vadd.f32 %v719, %v721
    %v724 = vadd.f32 %v720, %v722
    %v725 = vadd.f32 %v321, %v723
    %v726 = vadd.f32 %v323, %v724
    %v727 = vpack.c.bf16 %v726, %v725
    %v728 = vlaneseq
    %v729 = vshrl.u32 %v728, 7
    %v730 = vsub.s32 0, %v729
    %v731 = vrot.slane %v150, %v730
    %v748 = vunpack.c.l.b16 %v90
    %v749 = vunpack.c.l.b16 %v91
    %v750 = vunpack.c.l.b16 %v92
    %v751 = vunpack.c.l.b16 %v93
    %v752 = vunpack.c.l.b16 %v94
    %v753 = vunpack.c.l.b16 %v95
    %v754 = vunpack.c.l.b16 %v96
    %v755 = vunpack.c.l.b16 %v97
    %v756 = vunpack.c.l.b16 %v98
    %v757 = vunpack.c.l.b16 %v99
    %v758 = vunpack.c.l.b16 %v100
    %v759 = vunpack.c.l.b16 %v101
    %v760 = vunpack.c.l.b16 %v102
    %v761 = vunpack.c.l.b16 %v103
    %v762 = vunpack.c.l.b16 %v104
    %v763 = vunpack.c.l.b16 %v105
    %v764 = vpack.c.b16 %v749, %v748
    %v765 = vpack.c.b16 %v751, %v750
    %v766 = vpack.c.b16 %v753, %v752
    %v767 = vpack.c.b16 %v755, %v754
    %v768 = vpack.c.b16 %v757, %v756
    %v769 = vpack.c.b16 %v759, %v758
    %v770 = vpack.c.b16 %v761, %v760
    %v771 = vpack.c.b16 %v763, %v762
    %780 = vmatprep.subr.bf16.mxu0 0
    %781 = vmatpush1.bf16.msra.mxu0 %v771
    %782 = vmatprep.subr.bf16.mxu0 0
    %783 = vmatpush1.bf16.msra.mxu0 %v770
    %784 = vmatprep.subr.bf16.mxu0 0
    %785 = vmatpush1.bf16.msra.mxu0 %v769
    %786 = vmatprep.subr.bf16.mxu0 0
    %787 = vmatpush1.bf16.msra.mxu0 %v768
    %788 = vmatprep.subr.bf16.mxu0 0
    %789 = vmatpush1.bf16.msra.mxu0 %v767
    %790 = vmatprep.subr.bf16.mxu0 0
    %791 = vmatpush1.bf16.msra.mxu0 %v766
    %792 = vmatprep.subr.bf16.mxu0 0
    %793 = vmatpush1.bf16.msra.mxu0 %v765
    %794 = vmatprep.subr.bf16.mxu0 0
    %795 = vmatpush1.bf16.msra.mxu0 %v764
    %796 = vmatprep.subr.bf16.mxu0 0
    %797 = vmatpush2.bf16.msra.mxu0 0
    %798 = vmatprep.subr.bf16.mxu0 0
    %799 = vmatpush2.bf16.msra.mxu0 0
    %800 = vmatprep.subr.bf16.mxu0 0
    %801 = vmatpush2.bf16.msra.mxu0 0
    %802 = vmatprep.subr.bf16.mxu0 0
    %803 = vmatpush2.bf16.msra.mxu0 0
    %804 = vmatprep.subr.bf16.mxu0 0
    %805 = vmatpush2.bf16.msra.mxu0 0
    %806 = vmatprep.subr.bf16.mxu0 0
    %807 = vmatpush2.bf16.msra.mxu0 0
    %808 = vmatprep.subr.bf16.mxu0 0
    %809 = vmatpush2.bf16.msra.mxu0 0
    %810 = vmatprep.subr.bf16.mxu0 0
    %811 = vmatpush2.bf16.msra.mxu0 0
    %812 = vmatprep.mubr.bf16.mxu0 0
    %813 = vmatmul.mubr.bf16.gmra.mxu0 %v727
    %v814 = vpop.f32.mrf.mxu0
    %v815 = vadd.f32 %v731, %v814
    %v816 = vpop.f32.mrf.mxu0
    %v817 = vpop.f32.mrf.mxu0
    %v818 = vadd.f32 %v731, %v817
    %v819 = vpop.f32.mrf.mxu0
    %820 = vdwg.mxu0
    %vm821 = vcmp.gt.f32.partialorder %v815, 0.0
    %vm822 = vcmp.gt.f32.partialorder %v818, 0.0
    %v823 = vmin.f32 %v815, 0.0
    %v824 = vmin.f32 %v818, 0.0
    %v825 = vmul.f32 %v823, 1.442695
    %v826 = vpow.pop %v825
    %v827 = vmul.f32 %v824, 1.442695
    %v828 = vpow.pop %v827
    %v829 = vsub.f32 %v826, 1.0
    %v830 = vsub.f32 %v828, 1.0
    %v831 = vsel %vm821, %v815, %v829
    %v832 = vsel %vm822, %v818, %v830
    %v833 = vpack.c.bf16 %v832, %v831
    %v834 = vlaneseq
    %v835 = vshrl.u32 %v834, 7
    %v836 = vsub.s32 0, %v835
    %v837 = vrot.slane %v152, %v836
    %v854 = vunpack.c.l.b16 %v106
    %v855 = vunpack.c.l.b16 %v107
    %v856 = vunpack.c.l.b16 %v108
    %v857 = vunpack.c.l.b16 %v109
    %v858 = vunpack.c.l.b16 %v110
    %v859 = vunpack.c.l.b16 %v111
    %v860 = vunpack.c.l.b16 %v112
    %v861 = vunpack.c.l.b16 %v113
    %v862 = vunpack.c.l.b16 %v114
    %v863 = vunpack.c.l.b16 %v115
    %v864 = vunpack.c.l.b16 %v116
    %v865 = vunpack.c.l.b16 %v117
    %v866 = vunpack.c.l.b16 %v118
    %v867 = vunpack.c.l.b16 %v119
    %v868 = vunpack.c.l.b16 %v120
    %v869 = vunpack.c.l.b16 %v121
    %v870 = vpack.c.b16 %v855, %v854
    %v871 = vpack.c.b16 %v857, %v856
    %v872 = vpack.c.b16 %v859, %v858
    %v873 = vpack.c.b16 %v861, %v860
    %v874 = vpack.c.b16 %v863, %v862
    %v875 = vpack.c.b16 %v865, %v864
    %v876 = vpack.c.b16 %v867, %v866
    %v877 = vpack.c.b16 %v869, %v868
    %886 = vmatprep.subr.bf16.mxu0 0
    %887 = vmatpush1.bf16.msra.mxu0 %v877
    %888 = vmatprep.subr.bf16.mxu0 0
    %889 = vmatpush1.bf16.msra.mxu0 %v876
    %890 = vmatprep.subr.bf16.mxu0 0
    %891 = vmatpush1.bf16.msra.mxu0 %v875
    %892 = vmatprep.subr.bf16.mxu0 0
    %893 = vmatpush1.bf16.msra.mxu0 %v874
    %894 = vmatprep.subr.bf16.mxu0 0
    %895 = vmatpush1.bf16.msra.mxu0 %v873
    %896 = vmatprep.subr.bf16.mxu0 0
    %897 = vmatpush1.bf16.msra.mxu0 %v872
    %898 = vmatprep.subr.bf16.mxu0 0
    %899 = vmatpush1.bf16.msra.mxu0 %v871
    %900 = vmatprep.subr.bf16.mxu0 0
    %901 = vmatpush1.bf16.msra.mxu0 %v870
    %902 = vmatprep.subr.bf16.mxu0 0
    %903 = vmatpush2.bf16.msra.mxu0 0
    %904 = vmatprep.subr.bf16.mxu0 0
    %905 = vmatpush2.bf16.msra.mxu0 0
    %906 = vmatprep.subr.bf16.mxu0 0
    %907 = vmatpush2.bf16.msra.mxu0 0
    %908 = vmatprep.subr.bf16.mxu0 0
    %909 = vmatpush2.bf16.msra.mxu0 0
    %910 = vmatprep.subr.bf16.mxu0 0
    %911 = vmatpush2.bf16.msra.mxu0 0
    %912 = vmatprep.subr.bf16.mxu0 0
    %913 = vmatpush2.bf16.msra.mxu0 0
    %914 = vmatprep.subr.bf16.mxu0 0
    %915 = vmatpush2.bf16.msra.mxu0 0
    %916 = vmatprep.subr.bf16.mxu0 0
    %917 = vmatpush2.bf16.msra.mxu0 0
    %918 = vmatprep.mubr.bf16.mxu0 0
    %919 = vmatmul.mubr.bf16.gmra.mxu0 %v833
    %v920 = vpop.f32.mrf.mxu0
    %v921 = vadd.f32 %v837, %v920
    %v922 = vpop.f32.mrf.mxu0
    %v923 = vpop.f32.mrf.mxu0
    %v924 = vadd.f32 %v837, %v923
    %v925 = vpop.f32.mrf.mxu0
    %926 = vdwg.mxu0
    %vm927 = vcmp.gt.f32.partialorder %v921, 0.0
    %vm928 = vcmp.gt.f32.partialorder %v924, 0.0
    %v929 = vmin.f32 %v921, 0.0
    %v930 = vmin.f32 %v924, 0.0
    %v931 = vmul.f32 %v929, 1.442695
    %v932 = vpow.pop %v931
    %v933 = vmul.f32 %v930, 1.442695
    %v934 = vpow.pop %v933
    %v935 = vsub.f32 %v932, 1.0
    %v936 = vsub.f32 %v934, 1.0
    %v937 = vsel %vm927, %v921, %v935
    %v938 = vsel %vm928, %v924, %v936
    %v939 = vpack.c.bf16 %v938, %v937
    %v940 = vlaneseq
    %v941 = vshrl.u32 %v940, 7
    %v942 = vsub.s32 0, %v941
    %v943 = vrot.slane %v154, %v942
    %v960 = vunpack.c.l.b16 %v122
    %v961 = vunpack.c.l.b16 %v123
    %v962 = vunpack.c.l.b16 %v124
    %v963 = vunpack.c.l.b16 %v125
    %v964 = vunpack.c.l.b16 %v126
    %v965 = vunpack.c.l.b16 %v127
    %v966 = vunpack.c.l.b16 %v128
    %v967 = vunpack.c.l.b16 %v129
    %v968 = vunpack.c.l.b16 %v130
    %v969 = vunpack.c.l.b16 %v131
    %v970 = vunpack.c.l.b16 %v132
    %v971 = vunpack.c.l.b16 %v133
    %v972 = vunpack.c.l.b16 %v134
    %v973 = vunpack.c.l.b16 %v135
    %v974 = vunpack.c.l.b16 %v136
    %v975 = vunpack.c.l.b16 %v137
    %v976 = vpack.c.b16 %v961, %v960
    %v977 = vpack.c.b16 %v963, %v962
    %v978 = vpack.c.b16 %v965, %v964
    %v979 = vpack.c.b16 %v967, %v966
    %v980 = vpack.c.b16 %v969, %v968
    %v981 = vpack.c.b16 %v971, %v970
    %v982 = vpack.c.b16 %v973, %v972
    %v983 = vpack.c.b16 %v975, %v974
    %992 = vmatprep.subr.bf16.mxu0 0
    %993 = vmatpush1.bf16.msra.mxu0 %v983
    %994 = vmatprep.subr.bf16.mxu0 0
    %995 = vmatpush1.bf16.msra.mxu0 %v982
    %996 = vmatprep.subr.bf16.mxu0 0
    %997 = vmatpush1.bf16.msra.mxu0 %v981
    %998 = vmatprep.subr.bf16.mxu0 0
    %999 = vmatpush1.bf16.msra.mxu0 %v980
    %1000 = vmatprep.subr.bf16.mxu0 0
    %1001 = vmatpush1.bf16.msra.mxu0 %v979
    %1002 = vmatprep.subr.bf16.mxu0 0
    %1003 = vmatpush1.bf16.msra.mxu0 %v978
    %1004 = vmatprep.subr.bf16.mxu0 0
    %1005 = vmatpush1.bf16.msra.mxu0 %v977
    %1006 = vmatprep.subr.bf16.mxu0 0
    %1007 = vmatpush1.bf16.msra.mxu0 %v976
    %1008 = vmatprep.subr.bf16.mxu0 0
    %1009 = vmatpush2.bf16.msra.mxu0 0
    %1010 = vmatprep.subr.bf16.mxu0 0
    %1011 = vmatpush2.bf16.msra.mxu0 0
    %1012 = vmatprep.subr.bf16.mxu0 0
    %1013 = vmatpush2.bf16.msra.mxu0 0
    %1014 = vmatprep.subr.bf16.mxu0 0
    %1015 = vmatpush2.bf16.msra.mxu0 0
    %1016 = vmatprep.subr.bf16.mxu0 0
    %1017 = vmatpush2.bf16.msra.mxu0 0
    %1018 = vmatprep.subr.bf16.mxu0 0
    %1019 = vmatpush2.bf16.msra.mxu0 0
    %1020 = vmatprep.subr.bf16.mxu0 0
    %1021 = vmatpush2.bf16.msra.mxu0 0
    %1022 = vmatprep.subr.bf16.mxu0 0
    %1023 = vmatpush2.bf16.msra.mxu0 0
    %1024 = vmatprep.mubr.bf16.mxu0 0
    %1025 = vmatmul.mubr.bf16.gmra.mxu0 %v939
    %v1026 = vpop.f32.mrf.mxu0
    %v1027 = vadd.f32 %v943, %v1026
    %v1028 = vpop.f32.mrf.mxu0
    %v1029 = vpop.f32.mrf.mxu0
    %v1030 = vadd.f32 %v943, %v1029
    %v1031 = vpop.f32.mrf.mxu0
    %1032 = vdwg.mxu0
    %1033 = vst [vmem:[%s2] sm:$0xff] %v1027
    %1034 = vst [vmem:[%s2 + $0x10] sm:$0xff] %v1030
    %1035 = vst [vmem:[%s2 + $0x8] sm:$0xff] %v723
    %1036 = vst [vmem:[%s2 + $0x18] sm:$0xff] %v724
    // Predicated region
    $region14: #{actor_critic_forward.1} parent=1 // pred_check
      _
    $region15: #{actor_critic_forward.1} parent=1 // pred_check_branch
      %1038 = sbr.rel (0) target = $region17
    $region16: #{actor_critic_forward.1} parent=1 // pred_region
      _
    $region17: #{actor_critic_forward.1} parent=1 // pred_fallthru
      _
    // Predicated region
    $region18: #{actor_critic_forward.1} parent=1 // pred_check
      _
    $region19: #{actor_critic_forward.1} parent=1 // pred_check_branch
      %1040 = sbr.rel (0) target = $region21
    $region20: #{actor_critic_forward.1} parent=1 // pred_region
      _
    $region21: #{actor_critic_forward.1} parent=1 // pred_fallthru
      _
    %1041 = vsyncpa [#allocation3], 1

</llo_original>
